<compile_context>
chip_gen: v7x
topology: tpu7x:2x2x1
jax: 0.10.0
libtpu: 0.0.40
codegen_flags: <defaults>
</compile_context>

<pallas_src>
import functools
import math

import jax
import jax.numpy as jnp
from jax.experimental import pallas as pl
from jax.experimental.pallas import tpu as pltpu

LN_EPS = 1e-5
_VMEM_HEADROOM = 8 << 20


def _resblock_kernel(x_ref, gamma_ref, beta_ref, w1_ref, b1_ref, w2_ref, b2_ref,
                     o_ref, xn_ref, acc_ref, *, valid_channels, matmul_dtype,
                     gelu_approx):
    """One (tm, Cp) token tile x one tn-wide hidden tile of
    LayerNorm -> Linear -> GELU -> Linear -> +residual(normed x)."""
    j = pl.program_id(1)

    @pl.when(j == 0)
    def _():
        x = x_ref[...].astype(jnp.float32)
        inv_c = 1.0 / valid_channels
        # Padded channel columns of x are zero, so both channel sums already
        # run over the real channels only.  One-pass variance (E[x^2]-mean^2)
        # avoids the iota/where mask; cancellation is negligible for
        # normalized activations (clamped at 0 for safety).
        mean = jnp.sum(x, axis=-1, keepdims=True) * inv_c
        ex2 = jnp.sum(x * x, axis=-1, keepdims=True) * inv_c
        var = jnp.maximum(ex2 - mean * mean, 0.0)
        xn = (x - mean) * jax.lax.rsqrt(var + LN_EPS)
        # Padded gamma/beta entries are zero -> padded columns of xn stay zero.
        xn = xn * gamma_ref[...] + beta_ref[...]
        # Residual comes from the *normalized* x (as in the PyTorch forward);
        # fold the second Linear's bias in here so the hidden loop is a pure
        # accumulate.
        acc_ref[...] = xn + b2_ref[...]
        # Cast to the MXU dtype exactly once; reused by every hidden tile.
        xn_ref[...] = xn.astype(matmul_dtype)

    h = jnp.dot(xn_ref[...], w1_ref[...],
                preferred_element_type=jnp.float32) + b1_ref[...]
    if gelu_approx:
        # tanh GELU runs on the EUP (nearly free bundle slot) -- useful on v5e
        # at small C where the VALU binds; numerics differ slightly from erf.
        h = jax.nn.gelu(h, approximate=True)
    else:
        # nn.GELU() default is the exact erf form; keep it for fidelity.
        h = 0.5 * h * (1.0 + jax.lax.erf(h * (1.0 / math.sqrt(2.0))))
    acc_ref[...] += jnp.dot(h.astype(matmul_dtype), w2_ref[...],
                            preferred_element_type=jnp.float32)

    @pl.when(j == pl.num_programs(1) - 1)
    def _():
        o_ref[...] = acc_ref[...].astype(o_ref.dtype)


def _round_up(n, m):
    return ((n + m - 1) // m) * m


def _pad2d(a, rows, cols):
    r, c = a.shape
    if r == rows and c == cols:
        return a
    return jnp.pad(a, ((0, rows - r), (0, cols - c)))


def _device_vmem_bytes():
    # Physical VMEM per TensorCore (v5e/v6e: 128 MiB, v7x: 64 MiB).
    try:
        return int(pltpu.get_tpu_info().vmem_capacity_bytes)
    except Exception:
        return 64 << 20  # conservative fallback covers v7x


@functools.lru_cache(maxsize=1)
def _buffered_params_supported():
    """Capability probe: can constant-index inputs be single-buffered via
    pipeline_mode=pl.Buffered(1)?  This is a tiny throwaway compile; the real
    kernel's compile is NOT wrapped in an except, so genuine failures surface."""
    if not hasattr(pl, "Buffered"):
        return False

    def _copy(x_ref, o_ref):
        o_ref[...] = x_ref[...]

    try:
        spec = pl.BlockSpec((8, 128), lambda i: (0, 0),
                            pipeline_mode=pl.Buffered(1))
        fn = pl.pallas_call(
            _copy,
            out_shape=jax.ShapeDtypeStruct((16, 128), jnp.float32),
            grid=(2,),
            in_specs=[spec],
            out_specs=pl.BlockSpec((8, 128), lambda i: (i, 0)),
        )
        jax.block_until_ready(fn(jnp.zeros((8, 128), jnp.float32)))
        return True
    except Exception:
        return False


def simple_res_block(x, gamma, beta, w1, b1, w2, b2, *, tm=512,
                     matmul_dtype=jnp.bfloat16, gelu_approx=False):
    """SimpleResBlock forward.

    x: (..., C).  gamma/beta/b1/b2: (C,).  w1/w2: (C, C) stored (in, out),
    i.e. the transpose of the PyTorch nn.Linear weight.
    """
    orig_shape = x.shape
    C = orig_shape[-1]
    x2 = x.reshape(-1, C)
    M = x2.shape[0]
    out_dtype = x.dtype

    f32 = jnp.float32
    w_dtype = jnp.dtype(matmul_dtype)
    x_isz = jnp.dtype(x.dtype).itemsize
    o_isz = jnp.dtype(out_dtype).itemsize
    w_isz = w_dtype.itemsize

    # ---- token tiling: balanced bands; >=2 bands when M allows so the
    # "parallel" axis can shard across both v7x TensorCores. ----
    Cp = _round_up(C, 128)                       # lane-dense channels
    min_bands = 2 if M > 8 else 1
    bands = max(-(-M // tm), min_bands)
    tm_eff = _round_up(-(-M // bands), 8)

    # ---- VMEM planning, clamped to the device's physical VMEM. ----
    budget = _device_vmem_bytes() - _VMEM_HEADROOM

    def io_scratch_bytes(tm_):
        fixed = (2 * tm_ * Cp * x_isz            # x tile (double-buffered)
                 + 2 * tm_ * Cp * o_isz          # out tile (double-buffered)
                 + tm_ * Cp * (4 + w_isz)        # acc (f32) + xn (mxu dtype) scratch
                 + 3 * 2 * Cp * 4)               # gamma/beta/b2 blocks
        interm = 5 * tm_ * Cp * 4                # xn/h/cast temps spilled to VMEM
        return fixed + interm

    def weight_bytes(tn_, nbuf):
        # w1 (Cp, tn) + w2 (tn, Cp) blocks plus the b1 (1, tn) block.
        return nbuf * (2 * Cp * tn_ * w_isz + tn_ * 4)

    # Shrink the token tile if even a 128-wide hidden slice can't fit.
    while tm_eff > 8 and io_scratch_bytes(tm_eff) + weight_bytes(128, 2) > budget:
        tm_eff = max(8, _round_up(tm_eff // 2, 8))
    grid_m = -(-M // tm_eff)
    Mp = grid_m * tm_eff

    # ---- hidden-dim tiling: keep full weights resident when they fit,
    # otherwise stream (Cp, tn)/(tn, Cp) slices along an "arbitrary" axis. ----
    buffered_ok = _buffered_params_supported()
    base = io_scratch_bytes(tm_eff)
    nbuf_resident = 1 if buffered_ok else 2
    k_lanes = Cp // 128
    tn, grid_h = Cp, 1
    if base + weight_bytes(Cp, nbuf_resident) > budget:
        for gh in range(2, k_lanes + 1):
            if k_lanes % gh:
                continue
            if base + weight_bytes(Cp // gh, 2) <= budget:
                tn, grid_h = Cp // gh, gh
                break
        else:
            tn, grid_h = 128, k_lanes

    single_buffer_w = buffered_ok and grid_h == 1
    w_nbuf = 1 if single_buffer_w else 2
    vmem_limit = base + weight_bytes(tn, w_nbuf) + (4 << 20)
    vmem_limit = max(vmem_limit, 32 << 20)
    vmem_limit = min(vmem_limit, _device_vmem_bytes() - _VMEM_HEADROOM)

    # ---- pad operands (zeros: masked out of LN stats / matmuls by design) ----
    x2p = _pad2d(x2, Mp, Cp)
    gamma2 = _pad2d(gamma.astype(f32).reshape(1, C), 1, Cp)
    beta2 = _pad2d(beta.astype(f32).reshape(1, C), 1, Cp)
    b1_2 = _pad2d(b1.astype(f32).reshape(1, C), 1, Cp)
    b2_2 = _pad2d(b2.astype(f32).reshape(1, C), 1, Cp)
    w1p = _pad2d(w1.astype(w_dtype), Cp, Cp)
    w2p = _pad2d(w2.astype(w_dtype), Cp, Cp)

    kernel = functools.partial(_resblock_kernel, valid_channels=C,
                               matmul_dtype=w_dtype, gelu_approx=gelu_approx)

    # Constant-index params (gamma/beta/b2 always; w1/b1/w2 only when there is
    # a single hidden step) can be single-buffered -> big VMEM saving.
    buf1 = dict(pipeline_mode=pl.Buffered(1)) if buffered_ok else {}
    bufw = buf1 if grid_h == 1 else {}

    out = pl.pallas_call(
        kernel,
        out_shape=jax.ShapeDtypeStruct((Mp, Cp), out_dtype),
        grid_spec=pltpu.PrefetchScalarGridSpec(
            num_scalar_prefetch=0,
            grid=(grid_m, grid_h),
            in_specs=[
                pl.BlockSpec((tm_eff, Cp), lambda i, j: (i, 0)),        # x
                pl.BlockSpec((1, Cp), lambda i, j: (0, 0), **buf1),     # gamma
                pl.BlockSpec((1, Cp), lambda i, j: (0, 0), **buf1),     # beta
                pl.BlockSpec((Cp, tn), lambda i, j: (0, j), **bufw),    # w1
                pl.BlockSpec((1, tn), lambda i, j: (0, j), **bufw),     # b1
                pl.BlockSpec((tn, Cp), lambda i, j: (j, 0), **bufw),    # w2
                pl.BlockSpec((1, Cp), lambda i, j: (0, 0), **buf1),     # b2
            ],
            out_specs=pl.BlockSpec((tm_eff, Cp), lambda i, j: (i, 0)),
            scratch_shapes=[
                pltpu.VMEM((tm_eff, Cp), w_dtype),       # xn in matmul dtype
                pltpu.VMEM((tm_eff, Cp), jnp.float32),   # accumulator/residual
            ],
        ),
        compiler_params=pltpu.CompilerParams(
            dimension_semantics=("parallel", "arbitrary"),
            vmem_limit_bytes=int(vmem_limit),
        ),
    )(x2p, gamma2, beta2, w1p, b1_2, w2p, b2_2)

    return out[:M, :C].reshape(orig_shape)


def _reference(x, gamma, beta, w1, b1, w2, b2):
    xf = x.astype(jnp.float32)
    mean = jnp.mean(xf, axis=-1, keepdims=True)
    var = jnp.mean(jnp.square(xf - mean), axis=-1, keepdims=True)
    xn = (xf - mean) / jnp.sqrt(var + LN_EPS) * gamma + beta
    h = xn @ w1 + b1
    h = 0.5 * h * (1.0 + jax.lax.erf(h / jnp.sqrt(2.0)))
    y = h @ w2 + b2
    return (xn + y).astype(x.dtype)


if __name__ == "__main__":
    key = jax.random.PRNGKey(0)
    B, S, C = 2, 8, 32  # small shapes consistent with the module

    k_x, k_g, k_b, k_w1, k_b1, k_w2, k_b2 = jax.random.split(key, 7)
    x = jax.random.normal(k_x, (B, S, C), dtype=jnp.float32)

    # Deterministic synthetic parameters (shapes match nn.LayerNorm(C) and
    # nn.Linear(C, C); weights stored transposed, i.e. (in, out)).
    gamma = 1.0 + 0.1 * jax.random.normal(k_g, (C,), dtype=jnp.float32)
    beta = 0.1 * jax.random.normal(k_b, (C,), dtype=jnp.float32)
    bound = 1.0 / math.sqrt(C)
    w1 = jax.random.uniform(k_w1, (C, C), minval=-bound, maxval=bound,
                            dtype=jnp.float32)
    b1 = jax.random.uniform(k_b1, (C,), minval=-bound, maxval=bound,
                            dtype=jnp.float32)
    w2 = jax.random.uniform(k_w2, (C, C), minval=-bound, maxval=bound,
                            dtype=jnp.float32)
    b2 = jax.random.uniform(k_b2, (C,), minval=-bound, maxval=bound,
                            dtype=jnp.float32)

    ref = _reference(x, gamma, beta, w1, b1, w2, b2)

    # Exact (f32 matmul) path: tight check against the PyTorch-equivalent math.
    out_f32 = simple_res_block(x, gamma, beta, w1, b1, w2, b2,
                               matmul_dtype=jnp.float32)
    out_f32 = jax.block_until_ready(out_f32)
    assert out_f32.shape == x.shape and out_f32.dtype == x.dtype
    assert jnp.allclose(out_f32, ref, atol=5e-4, rtol=5e-4), \
        "f32 path mismatch vs reference"

    # Default fast path: bf16 MXU operands with f32 accumulation.
    out = simple_res_block(x, gamma, beta, w1, b1, w2, b2)
    out = jax.block_until_ready(out)
    assert out.shape == x.shape and out.dtype == x.dtype
    assert jnp.allclose(out, ref, atol=5e-2, rtol=5e-2), \
        "bf16 path mismatch vs reference"

    print("KERNEL_OK")
</pallas_src>

<mosaic_0001>
module attributes {stable_mosaic.version = 11 : i64} {
  func.func @_copy(%arg0: i32, %arg1: memref<8x128xf32, #tpu.memory_space<vmem>>, %arg2: memref<8x128xf32, #tpu.memory_space<vmem>>) attributes {dimension_semantics = [#tpu.dimension_semantics<arbitrary>], iteration_bounds = array<i64: 2>, scalar_prefetch = 0 : i64, scratch_operands = 0 : i64, tpu.core_type = #tpu.core_type<tc>, window_params = [{pipeline_mode = #tpu.pipeline_mode<synchronous>, transform_indices = @transform_0, window_bounds = array<i64: 8, 128>}, {transform_indices = @transform_1, window_bounds = array<i64: 8, 128>}]} {
    %c0 = arith.constant 0 : index
    %c0_0 = arith.constant 0 : index
    %0 = vector.load %arg1[%c0, %c0_0] : memref<8x128xf32, #tpu.memory_space<vmem>>, vector<8x128xf32>
    %c0_1 = arith.constant 0 : index
    %c0_2 = arith.constant 0 : index
    %1 = vector.load %arg2[%c0_1, %c0_2] : memref<8x128xf32, #tpu.memory_space<vmem>>, vector<8x128xf32>
    tpu.vector_store %arg2[%c0_1, %c0_2], %0 {strides = array<i32>} : memref<8x128xf32, #tpu.memory_space<vmem>>, vector<8x128xf32>,
    return
  }
  func.func @transform_0(%arg0: i32) -> (i32, i32) {
    %c0_i32 = arith.constant 0 : i32
    %c0_i32_0 = arith.constant 0 : i32
    %c0_i32_1 = arith.constant 0 : i32
    return %c0_i32, %c0_i32_0 : i32, i32
  }
  func.func @transform_1(%arg0: i32) -> (i32, i32) {
    %c0_i32 = arith.constant 0 : i32
    %c0_i32_0 = arith.constant 0 : i32
    return %arg0, %c0_i32 : i32, i32
  }
}

module attributes {stable_mosaic.version = 11 : i64} {
  func.func @_resblock_kernel(%arg0: i32, %arg1: i32, %arg2: memref<8x128xf32, #tpu.memory_space<vmem>>, %arg3: memref<1x128xf32, #tpu.memory_space<vmem>>, %arg4: memref<1x128xf32, #tpu.memory_space<vmem>>, %arg5: memref<128x128xf32, #tpu.memory_space<vmem>>, %arg6: memref<1x128xf32, #tpu.memory_space<vmem>>, %arg7: memref<128x128xf32, #tpu.memory_space<vmem>>, %arg8: memref<1x128xf32, #tpu.memory_space<vmem>>, %arg9: memref<8x128xf32, #tpu.memory_space<vmem>>, %arg10: memref<8x128xf32, #tpu.memory_space<vmem>>, %arg11: memref<8x128xf32, #tpu.memory_space<vmem>>) attributes {dimension_semantics = [#tpu.dimension_semantics<parallel>, #tpu.dimension_semantics<arbitrary>], iteration_bounds = array<i64: 2, 1>, scalar_prefetch = 0 : i64, scratch_operands = 2 : i64, tpu.core_type = #tpu.core_type<tc>, window_params = [{transform_indices = @transform_0, window_bounds = array<i64: 8, 128>}, {pipeline_mode = #tpu.pipeline_mode<synchronous>, transform_indices = @transform_1, window_bounds = array<i64: 1, 128>}, {pipeline_mode = #tpu.pipeline_mode<synchronous>, transform_indices = @transform_2, window_bounds = array<i64: 1, 128>}, {transform_indices = @transform_3, window_bounds = array<i64: 128, 128>}, {transform_indices = @transform_4, window_bounds = array<i64: 1, 128>}, {transform_indices = @transform_5, window_bounds = array<i64: 128, 128>}, {pipeline_mode = #tpu.pipeline_mode<synchronous>, transform_indices = @transform_6, window_bounds = array<i64: 1, 128>}, {transform_indices = @transform_7, window_bounds = array<i64: 8, 128>}]} {
    %c0_i32 = arith.constant 0 : i32
    %0 = arith.cmpi eq, %arg1, %c0_i32 : i32
    %1 = arith.extui %0 : i1 to i32
    %c0_i32_0 = arith.constant 0 : i32
    %2 = arith.cmpi ne, %1, %c0_i32_0 : i32
    scf.if %2 {
      %c0_18 = arith.constant 0 : index
      %c0_19 = arith.constant 0 : index
      %25 = vector.load %arg2[%c0_18, %c0_19] : memref<8x128xf32, #tpu.memory_space<vmem>>, vector<8x128xf32>
      %cst_20 = arith.constant dense<0.000000e+00> : vector<8xf32>
      %26 = vector.multi_reduction <add>, %25, %cst_20 [1] : vector<8x128xf32> to vector<8xf32>
      %27 = vector.shape_cast %26 : vector<8xf32> to vector<8x1xf32>
      %cst_21 = arith.constant 3.125000e-02 : f32
      %28 = vector.broadcast %cst_21 : f32 to vector<8x1xf32>
      %29 = arith.mulf %27, %28 : vector<8x1xf32>
      %30 = arith.mulf %25, %25 : vector<8x128xf32>
      %cst_22 = arith.constant dense<0.000000e+00> : vector<8xf32>
      %31 = vector.multi_reduction <add>, %30, %cst_22 [1] : vector<8x128xf32> to vector<8xf32>
      %32 = vector.shape_cast %31 : vector<8xf32> to vector<8x1xf32>
      %cst_23 = arith.constant 3.125000e-02 : f32
      %33 = vector.broadcast %cst_23 : f32 to vector<8x1xf32>
      %34 = arith.mulf %32, %33 : vector<8x1xf32>
      %35 = arith.mulf %29, %29 : vector<8x1xf32>
      %36 = arith.subf %34, %35 : vector<8x1xf32>
      %cst_24 = arith.constant 0.000000e+00 : f32
      %37 = vector.broadcast %cst_24 : f32 to vector<8x1xf32>
      %38 = arith.maximumf %36, %37 : vector<8x1xf32>
      %39 = vector.broadcast %29 : vector<8x1xf32> to vector<8x128xf32>
      %40 = arith.subf %25, %39 : vector<8x128xf32>
      %cst_25 = arith.constant 9.99999974E-6 : f32
      %41 = vector.broadcast %cst_25 : f32 to vector<8x1xf32>
      %42 = arith.addf %38, %41 : vector<8x1xf32>
      %43 = math.rsqrt %42 : vector<8x1xf32>
      %44 = vector.broadcast %43 : vector<8x1xf32> to vector<8x128xf32>
      %45 = arith.mulf %40, %44 : vector<8x128xf32>
      %c0_26 = arith.constant 0 : index
      %c0_27 = arith.constant 0 : index
      %46 = vector.load %arg3[%c0_26, %c0_27] : memref<1x128xf32, #tpu.memory_space<vmem>>, vector<1x128xf32>
      %47 = vector.broadcast %46 : vector<1x128xf32> to vector<8x128xf32>
      %48 = arith.mulf %45, %47 : vector<8x128xf32>
      %c0_28 = arith.constant 0 : index
      %c0_29 = arith.constant 0 : index
      %49 = vector.load %arg4[%c0_28, %c0_29] : memref<1x128xf32, #tpu.memory_space<vmem>>, vector<1x128xf32>
      %50 = vector.broadcast %49 : vector<1x128xf32> to vector<8x128xf32>
      %51 = arith.addf %48, %50 : vector<8x128xf32>
      %c0_30 = arith.constant 0 : index
      %c0_31 = arith.constant 0 : index
      %52 = vector.load %arg8[%c0_30, %c0_31] : memref<1x128xf32, #tpu.memory_space<vmem>>, vector<1x128xf32>
      %53 = vector.broadcast %52 : vector<1x128xf32> to vector<8x128xf32>
      %54 = arith.addf %51, %53 : vector<8x128xf32>
      %c0_32 = arith.constant 0 : index
      %c0_33 = arith.constant 0 : index
      %55 = vector.load %arg11[%c0_32, %c0_33] : memref<8x128xf32, #tpu.memory_space<vmem>>, vector<8x128xf32>
      tpu.vector_store %arg11[%c0_32, %c0_33], %54 {strides = array<i32>} : memref<8x128xf32, #tpu.memory_space<vmem>>, vector<8x128xf32>,
      %c0_34 = arith.constant 0 : index
      %c0_35 = arith.constant 0 : index
      %56 = vector.load %arg10[%c0_34, %c0_35] : memref<8x128xf32, #tpu.memory_space<vmem>>, vector<8x128xf32>
      tpu.vector_store %arg10[%c0_34, %c0_35], %51 {strides = array<i32>} : memref<8x128xf32, #tpu.memory_space<vmem>>, vector<8x128xf32>,
    } else {
    }
    %c0 = arith.constant 0 : index
    %c0_1 = arith.constant 0 : index
    %3 = vector.load %arg10[%c0, %c0_1] : memref<8x128xf32, #tpu.memory_space<vmem>>, vector<8x128xf32>
    %c0_2 = arith.constant 0 : index
    %c0_3 = arith.constant 0 : index
    %4 = vector.load %arg5[%c0_2, %c0_3] : memref<128x128xf32, #tpu.memory_space<vmem>>, vector<128x128xf32>
    %cst = arith.constant dense<0.000000e+00> : vector<8x128xf32>
    %5 = tpu.matmul %3, %4, %cst {dimension_numbers = #tpu.dot_dimension_numbers<[1], [0], [0], [1], [0, 0, 1, 1], [], []>} : vector<8x128xf32>, vector<128x128xf32>, vector<8x128xf32> -> vector<8x128xf32>
    %c0_4 = arith.constant 0 : index
    %c0_5 = arith.constant 0 : index
    %6 = vector.load %arg6[%c0_4, %c0_5] : memref<1x128xf32, #tpu.memory_space<vmem>>, vector<1x128xf32>
    %7 = vector.broadcast %6 : vector<1x128xf32> to vector<8x128xf32>
    %8 = arith.addf %5, %7 : vector<8x128xf32>
    %cst_6 = arith.constant 5.000000e-01 : f32
    %9 = vector.broadcast %cst_6 : f32 to vector<8x128xf32>
    %10 = arith.mulf %9, %8 : vector<8x128xf32>
    %cst_7 = arith.constant 0.707106769 : f32
    %11 = vector.broadcast %cst_7 : f32 to vector<8x128xf32>
    %12 = arith.mulf %8, %11 : vector<8x128xf32>
    %13 = math.erf %12 : vector<8x128xf32>
    %cst_8 = arith.constant 1.000000e+00 : f32
    %14 = vector.broadcast %cst_8 : f32 to vector<8x128xf32>
    %15 = arith.addf %14, %13 : vector<8x128xf32>
    %16 = arith.mulf %10, %15 : vector<8x128xf32>
    %c0_9 = arith.constant 0 : index
    %c0_10 = arith.constant 0 : index
    %17 = vector.load %arg11[%c0_9, %c0_10] : memref<8x128xf32, #tpu.memory_space<vmem>>, vector<8x128xf32>
    %c0_11 = arith.constant 0 : index
    %c0_12 = arith.constant 0 : index
    %18 = vector.load %arg7[%c0_11, %c0_12] : memref<128x128xf32, #tpu.memory_space<vmem>>, vector<128x128xf32>
    %cst_13 = arith.constant dense<0.000000e+00> : vector<8x128xf32>
    %19 = tpu.matmul %16, %18, %cst_13 {dimension_numbers = #tpu.dot_dimension_numbers<[1], [0], [0], [1], [0, 0, 1, 1], [], []>} : vector<8x128xf32>, vector<128x128xf32>, vector<8x128xf32> -> vector<8x128xf32>
    %20 = arith.addf %17, %19 : vector<8x128xf32>
    %c0_14 = arith.constant 0 : index
    %c0_15 = arith.constant 0 : index
    %21 = vector.load %arg11[%c0_14, %c0_15] : memref<8x128xf32, #tpu.memory_space<vmem>>, vector<8x128xf32>
    tpu.vector_store %arg11[%c0_14, %c0_15], %20 {strides = array<i32>} : memref<8x128xf32, #tpu.memory_space<vmem>>, vector<8x128xf32>,
    %c0_i32_16 = arith.constant 0 : i32
    %22 = arith.cmpi eq, %arg1, %c0_i32_16 : i32
    %23 = arith.extui %22 : i1 to i32
    %c0_i32_17 = arith.constant 0 : i32
    %24 = arith.cmpi ne, %23, %c0_i32_17 : i32
    scf.if %24 {
      %c0_18 = arith.constant 0 : index
      %c0_19 = arith.constant 0 : index
      %25 = vector.load %arg11[%c0_18, %c0_19] : memref<8x128xf32, #tpu.memory_space<vmem>>, vector<8x128xf32>
      %c0_20 = arith.constant 0 : index
      %c0_21 = arith.constant 0 : index
      %26 = vector.load %arg9[%c0_20, %c0_21] : memref<8x128xf32, #tpu.memory_space<vmem>>, vector<8x128xf32>
      tpu.vector_store %arg9[%c0_20, %c0_21], %25 {strides = array<i32>} : memref<8x128xf32, #tpu.memory_space<vmem>>, vector<8x128xf32>,
    } else {
    }
    return
  }
  func.func @transform_0(%arg0: i32, %arg1: i32) -> (i32, i32) {
    %c0_i32 = arith.constant 0 : i32
    %c0_i32_0 = arith.constant 0 : i32
    return %arg0, %c0_i32 : i32, i32
  }
  func.func @transform_1(%arg0: i32, %arg1: i32) -> (i32, i32) {
    %c0_i32 = arith.constant 0 : i32
    %c0_i32_0 = arith.constant 0 : i32
    %c0_i32_1 = arith.constant 0 : i32
    return %c0_i32, %c0_i32_0 : i32, i32
  }
  func.func @transform_2(%arg0: i32, %arg1: i32) -> (i32, i32) {
    %c0_i32 = arith.constant 0 : i32
    %c0_i32_0 = arith.constant 0 : i32
    %c0_i32_1 = arith.constant 0 : i32
    return %c0_i32, %c0_i32_0 : i32, i32
  }
  func.func @transform_3(%arg0: i32, %arg1: i32) -> (i32, i32) {
    %c0_i32 = arith.constant 0 : i32
    %c0_i32_0 = arith.constant 0 : i32
    return %c0_i32, %arg1 : i32, i32
  }
  func.func @transform_4(%arg0: i32, %arg1: i32) -> (i32, i32) {
    %c0_i32 = arith.constant 0 : i32
    %c0_i32_0 = arith.constant 0 : i32
    return %c0_i32, %arg1 : i32, i32
  }
  func.func @transform_5(%arg0: i32, %arg1: i32) -> (i32, i32) {
    %c0_i32 = arith.constant 0 : i32
    %c0_i32_0 = arith.constant 0 : i32
    return %arg1, %c0_i32 : i32, i32
  }
  func.func @transform_6(%arg0: i32, %arg1: i32) -> (i32, i32) {
    %c0_i32 = arith.constant 0 : i32
    %c0_i32_0 = arith.constant 0 : i32
    %c0_i32_1 = arith.constant 0 : i32
    return %c0_i32, %c0_i32_0 : i32, i32
  }
  func.func @transform_7(%arg0: i32, %arg1: i32) -> (i32, i32) {
    %c0_i32 = arith.constant 0 : i32
    %c0_i32_0 = arith.constant 0 : i32
    return %arg0, %c0_i32 : i32, i32
  }
}

</mosaic_0001>

<llo_original>
// kernel: tpu_custom_call.1
$region0: #{tpu_custom_call.1}
  #allocation0 [shape = 'u32[]', space=smem, size = 0x4, offset = 0x4, fixed_abs, tag = 'smem constant byte address 0x4 - core index']
  #allocation1 [shape = 'u32[144,128]{1,0:T(1,128)}', space=vmem, size = 0x12000, scoped, tag = 'internal scratch']
  %s0 = inlined_call_operand.hbm [shape: f32[8,128], index: 0, kind: input, shape index: {}]
  %s1 = inlined_call_operand.hbm [shape: f32[16,128], index: 1, kind: output, shape index: {}]
  %s2 = sld [smem:[#allocation0]]
  $region41: #{tpu_custom_call.1} parent=0
    _
  %s4 = ssub.s32 1, %s2
  %s5 = scalar_select 0, %s4, %s2
  $region1: #{tpu_custom_call.1} parent=0
    #allocation2 [shape = 'u8[4096]{0}', space=vmem, size = 0x1000, scoped, tag = 'input window, operand 0, single buffered']
    #allocation3 [shape = 's32[2]{0}', space=sflag, size = 0x8, scoped, tag = 'scoped memory for tpu_custom_call.1']
    #allocation4 [shape = 's32[2]{0}', space=sflag, size = 0x8, scoped, tag = 'scoped memory for tpu_custom_call.1']
    #allocation5 [shape = 'u8[8192]{0}', space=vmem, size = 0x2000, scoped, tag = 'output window, operand 0']
    %6 = vsyncpa [#allocation3], 0
    %7 = vsyncpa [#allocation4], 0
    %s8 = scalar_lea.sflag [#allocation4], 1
    %9 = vsyncpa %s8, 0
    loop: start=0, step=1, limit=4
    $region2: #{tpu_custom_call.1} parent=1 // loop_pre_header
      _
    $region3: #{tpu_custom_call.1} parent=1 // loop_header
      %s11 = sphi 0, %s15
      %p12 = scmp.ge.s32.totalorder %s11, 4
      %s19 = sphi 0, %s19
      %s21 = sphi 0, %s19
      %s22 = sphi 0, %s21
      %s36 = sphi 0, %s22
      %s42 = sphi 0, %s44
      %s45 = sphi 0, %s42
      %s46 = sphi 0, %s45
      %s62 = sphi 0, %s46
    $region4: #{tpu_custom_call.1} parent=1 // loop_header_branch
      %14 = sbr.rel (%p12) target = $region8
    $region5: #{tpu_custom_call.1} parent=1 // loop_body
      %s16 = ssub.s32 %s11, 1
      %s17 = ssub.s32 %s11, 2
      %s18 = sadd.s32 %s11, 1
      %s20 = sadd.s32 %s19, 1
      %p23 = scmp.eq.s32.totalorder %s11, 1
      %p24 = scmp.ne.s32.totalorder %s19, %s21
      %p25 = scmp.eq.s32.totalorder %s11, 0
      %p26 = por %p24, %p25
      %p27 = scmp.ne.s32.totalorder %s19, %s21
      %p28 = scmp.eq.s32.totalorder %s16, 1
      %p29 = por %p27, %p28
      %p30 = scmp.ne.s32.totalorder %s21, %s22
      %p31 = scmp.eq.s32.totalorder %s16, 0
      %p32 = por %p30, %p31
      %p33 = scmp.ne.s32.totalorder %s21, %s22
      %p34 = scmp.eq.s32.totalorder %s17, 1
      %p35 = por %p33, %p34
      %p37 = scmp.ne.s32.totalorder %s22, %s36
      %p38 = scmp.eq.s32.totalorder %s17, 0
      %p39 = por %p37, %p38
      %s40 = ssub.s32 %s11, %s18
      %p41 = scmp.eq.s32.totalorder %s40, 0
      %s43 = sadd.s32 %s42, 1
      %s44 = scalar_select %p41, %s42, %s43
      %p47 = pneg %p41
      %p48 = scmp.eq.s32.totalorder %s11, 1
      %p49 = por %p47, %p48
      %p50 = scmp.ne.s32.totalorder %s42, %s45
      %p51 = scmp.eq.s32.totalorder %s11, 0
      %p52 = por %p50, %p51
      %p53 = scmp.ne.s32.totalorder %s42, %s45
      %p54 = scmp.eq.s32.totalorder %s16, 1
      %p55 = por %p53, %p54
      %p56 = scmp.ne.s32.totalorder %s45, %s46
      %p57 = scmp.eq.s32.totalorder %s16, 0
      %p58 = por %p56, %p57
      %p59 = scmp.ne.s32.totalorder %s45, %s46
      %p60 = scmp.eq.s32.totalorder %s17, 1
      %p61 = por %p59, %p60
      %p63 = scmp.ne.s32.totalorder %s46, %s62
      %p64 = scmp.eq.s32.totalorder %s17, 0
      %p65 = por %p63, %p64
      %p66 = scmp.le.s32.totalorder 1, %s11
      %p67 = scmp.lt.s32.totalorder %s11, 3
      %p68 = pnand %p66, %p67
      %p69 = pneg %p68
      // Predicated region
      $region9: #{tpu_custom_call.1} parent=5 // pred_check
        _
      $region10: #{tpu_custom_call.1} parent=5 // pred_check_branch
        %71 = sbr.rel (%p68) target = $region12
      $region11: #{tpu_custom_call.1} parent=5 // pred_region
        %s72 = ssub.s32 %s11, 1
        // Predicated region
        $region13: #{tpu_custom_call.1} parent=11 // pred_check
          %p73 = pneg %p32
        $region14: #{tpu_custom_call.1} parent=11 // pred_check_branch
          %75 = sbr.rel (%p73) target = $region16
        $region15: #{tpu_custom_call.1} parent=11 // pred_region
          %s77 = ssub.s32 128, 128
          %78 = vsyncadd [#allocation3], %s77
          %s80 = sshll.u32 [#allocation2], 4
          %s81 = int_to_ptr.vmem [resolvable:$true] %s80
          %83 = dma.hbm_to_vmem [thread:$0]  %s0, 128, %s81, [#allocation3]
        $region16: #{tpu_custom_call.1} parent=11 // pred_fallthru
          _
      $region12: #{tpu_custom_call.1} parent=5 // pred_fallthru
        _
      %p84 = scmp.lt.s32.totalorder %s11, 2
      // Predicated region
      $region17: #{tpu_custom_call.1} parent=5 // pred_check
        %p85 = pneg %p84
      $region18: #{tpu_custom_call.1} parent=5 // pred_check_branch
        %87 = sbr.rel (%p85) target = $region20
      $region19: #{tpu_custom_call.1} parent=5 // pred_region
        _
      $region20: #{tpu_custom_call.1} parent=5 // pred_fallthru
        _
      %p88 = scmp.le.s32.totalorder 1, %s11
      %p89 = scmp.lt.s32.totalorder %s11, 3
      %p90 = pnand %p88, %p89
      %p91 = pneg %p90
      // Predicated region
      $region21: #{tpu_custom_call.1} parent=5 // pred_check
        _
      $region22: #{tpu_custom_call.1} parent=5 // pred_check_branch
        %93 = sbr.rel (%p90) target = $region24
      $region23: #{tpu_custom_call.1} parent=5 // pred_region
        %s94 = ssub.s32 %s11, 1
        // Predicated region
        $region25: #{tpu_custom_call.1} parent=23 // pred_check
          %p95 = pneg %p32
        $region26: #{tpu_custom_call.1} parent=23 // pred_check_branch
          %97 = sbr.rel (%p95) target = $region28
        $region27: #{tpu_custom_call.1} parent=23 // pred_region
          %98 = dma.done [#allocation3], 128
        $region28: #{tpu_custom_call.1} parent=23 // pred_fallthru
          _
        %p99 = pneg %p32
        %p100 = pneg %p29
        %p101 = pneg %p58
        %p102 = pneg %p55
        %s103 = sand.u32 %s45, 1
        %s104 = scalar_lea.sflag [#allocation4], %s103
        %s105 = sand.u32 %s45, 1
        %s106 = smul.addr %s105, 8
        %s107 = scalar_lea.vmem [#allocation5], %s106
        %v108 = vld [vmem:[#allocation2] sm:$0xff]
        %109 = vst [vmem:[%s107] sm:$0xff] %v108
        %s110 = sand.u32 %s45, 1
        %s111 = scalar_lea.sflag [#allocation4], %s110
        %s112 = sand.u32 %s45, 1
        %s113 = smul.addr %s112, 8
        %s114 = scalar_lea.vmem [#allocation5], %s113
        // Predicated region
        $region29: #{tpu_custom_call.1} parent=23 // pred_check
          %p115 = pneg %p55
        $region30: #{tpu_custom_call.1} parent=23 // pred_check_branch
          %117 = sbr.rel (%p115) target = $region32
        $region31: #{tpu_custom_call.1} parent=23 // pred_region
          %s119 = ssub.s32 128, 128
          %120 = vsyncadd %s111, %s119
          %s121 = smul.addr %s16, 128
          %s122 = scalar_lea.hbm %s1, %s121
          %s124 = sshll.u32 %s114, 4
          %s125 = int_to_ptr.vmem [resolvable:$true] %s124
          %127 = dma.vmem_to_hbm [thread:$0]  %s125, 128, %s122, %s111
        $region32: #{tpu_custom_call.1} parent=23 // pred_fallthru
          _
      $region24: #{tpu_custom_call.1} parent=5 // pred_fallthru
        _
      %p128 = scmp.le.s32.totalorder 2, %s11
      // Predicated region
      $region33: #{tpu_custom_call.1} parent=5 // pred_check
        %p129 = pneg %p128
      $region34: #{tpu_custom_call.1} parent=5 // pred_check_branch
        %131 = sbr.rel (%p129) target = $region36
      $region35: #{tpu_custom_call.1} parent=5 // pred_region
        %s132 = ssub.s32 %s11, 2
        // Predicated region
        $region37: #{tpu_custom_call.1} parent=35 // pred_check
          %p133 = pneg %p61
        $region38: #{tpu_custom_call.1} parent=35 // pred_check_branch
          %135 = sbr.rel (%p133) target = $region40
        $region39: #{tpu_custom_call.1} parent=35 // pred_region
          %s136 = sand.u32 %s46, 1
          %s137 = scalar_lea.sflag [#allocation4], %s136
          %s138 = sand.u32 %s46, 1
          %s139 = smul.addr %s138, 8
          %s140 = scalar_lea.vmem [#allocation5], %s139
          %141 = dma.done %s137, 128
        $region40: #{tpu_custom_call.1} parent=35 // pred_fallthru
          _
      $region36: #{tpu_custom_call.1} parent=5 // pred_fallthru
        _
    $region6: #{tpu_custom_call.1} parent=1 // loop_footer
      %s15 = sadd.s32 1, %s11
    $region7: #{tpu_custom_call.1} parent=1 // loop_footer_branch
      %10 = sbr.rel target = $region3
    $region8: #{tpu_custom_call.1} parent=1 // loop_exit
      _
    %142 = vsyncpa [#allocation3], 1
    %s143 = scalar_lea.sflag [#allocation3], 1
    %144 = vsyncpa %s143, 1
    %145 = vsyncpa [#allocation4], 1
    %s146 = scalar_lea.sflag [#allocation4], 1
    %147 = vsyncpa %s146, 1

// kernel: tpu_custom_call.1
$region0: #{tpu_custom_call.1}
  #allocation0 [shape = 'u32[]', space=smem, size = 0x4, offset = 0x4, fixed_abs, tag = 'smem constant byte address 0x4 - core index']
  #allocation1 [shape = 'u32[144,128]{1,0:T(1,128)}', space=vmem, size = 0x12000, scoped, tag = 'internal scratch']
  #allocation2 [shape = 'f32[8,128]{1,0:T(8,128)}', space=vmem, size = 0x1000, scoped, tag = 'scratch operand']
  #allocation3 [shape = 'f32[8,128]{1,0:T(8,128)}', space=vmem, size = 0x1000, scoped, tag = 'scratch operand']
  %s0 = inlined_call_operand.hbm [shape: f32[16,128], index: 0, kind: input, shape index: {}]
  %s1 = inlined_call_operand.vmem [shape: f32[1,128], index: 1, kind: input, shape index: {}]
  %s2 = inlined_call_operand.vmem [shape: f32[1,128], index: 2, kind: input, shape index: {}]
  %s3 = inlined_call_operand.hbm [shape: f32[128,128], index: 3, kind: input, shape index: {}]
  %s4 = inlined_call_operand.vmem [shape: f32[1,128], index: 4, kind: input, shape index: {}]
  %s5 = inlined_call_operand.hbm [shape: f32[128,128], index: 5, kind: input, shape index: {}]
  %s6 = inlined_call_operand.vmem [shape: f32[1,128], index: 6, kind: input, shape index: {}]
  %s7 = inlined_call_operand.hbm [shape: f32[16,128], index: 7, kind: output, shape index: {}]
  %s8 = sld [smem:[#allocation0]]
  $region81: #{tpu_custom_call.1} parent=0
    _
  %s10 = ssub.s32 1, %s8
  %s11 = scalar_select 0, %s10, %s8
  $region1: #{tpu_custom_call.1} parent=0
    #allocation4 [shape = 'u8[8192]{0}', space=vmem, size = 0x2000, scoped, tag = 'input window, operand 0']
    #allocation5 [shape = 's32[2]{0}', space=sflag, size = 0x8, scoped, tag = 'scoped memory for tpu_custom_call.1']
    #allocation6 [shape = 's32[2]{0}', space=sflag, size = 0x8, scoped, tag = 'scoped memory for tpu_custom_call.1']
    #allocation7 [shape = 'u8[65536]{0}', space=vmem, size = 0x10000, scoped, tag = 'input window, operand 3, single buffered']
    #allocation8 [shape = 's32[1]{0}', space=sflag, size = 0x4, scoped, tag = 'scoped memory for tpu_custom_call.1']
    #allocation9 [shape = 'u8[65536]{0}', space=vmem, size = 0x10000, scoped, tag = 'input window, operand 5, single buffered']
    #allocation10 [shape = 'u8[8192]{0}', space=vmem, size = 0x2000, scoped, tag = 'output window, operand 0']
    %12 = vsyncpa [#allocation5], 0
    %s13 = scalar_lea.sflag [#allocation5], 1
    %14 = vsyncpa %s13, 0
    %15 = vsyncpa [#allocation8], 0
    %16 = vsyncpa [#allocation6], 0
    %s17 = scalar_lea.sflag [#allocation6], 1
    %18 = vsyncpa %s17, 0
    loop: start=0, step=1, limit=4
    $region2: #{tpu_custom_call.1} parent=1 // loop_pre_header
      _
    $region3: #{tpu_custom_call.1} parent=1 // loop_header
      %s20 = sphi 0, %s24
      %p21 = scmp.ge.s32.totalorder %s20, 4
      %s27 = sphi 0, %s39
      %s28 = sphi 0, %s35
      %s29 = sphi 0, %s27
      %s30 = sphi 0, %s28
      %s31 = sphi 0, %s29
      %s32 = sphi 0, %s30
      %s42 = sphi 0, %s44
      %s45 = sphi 0, %s42
      %s46 = sphi 0, %s45
      %s62 = sphi 0, %s46
      %s66 = sphi 0, %s66
      %s68 = sphi 0, %s66
      %s69 = sphi 0, %s68
      %s83 = sphi 0, %s69
      %s87 = sphi 0, %s87
      %s89 = sphi 0, %s87
      %s90 = sphi 0, %s89
      %s104 = sphi 0, %s90
      %s110 = sphi 0, %s112
      %s113 = sphi 0, %s110
      %s114 = sphi 0, %s113
      %s130 = sphi 0, %s114
      %s136 = sphi 0, %s138
      %s139 = sphi 0, %s136
      %s140 = sphi 0, %s139
      %s156 = sphi 0, %s140
      %s162 = sphi 0, %s164
      %s165 = sphi 0, %s162
      %s166 = sphi 0, %s165
      %s182 = sphi 0, %s166
      %s186 = sphi 0, %s186
      %s188 = sphi 0, %s186
      %s189 = sphi 0, %s188
      %s203 = sphi 0, %s189
      %s209 = sphi 0, %s211
      %s212 = sphi 0, %s209
      %s213 = sphi 0, %s212
      %s229 = sphi 0, %s213
    $region4: #{tpu_custom_call.1} parent=1 // loop_header_branch
      %23 = sbr.rel (%p21) target = $region8
    $region5: #{tpu_custom_call.1} parent=1 // loop_body
      %s25 = ssub.s32 %s20, 1
      %s26 = ssub.s32 %s20, 2
      %s33 = sadd.s32 1, %s28
      %p34 = scmp.ge.s32.totalorder %s33, 1
      %s35 = scalar_select %p34, 0, %s33
      %s36 = sadd.s32 1, %s27
      %s37 = scalar_select %p34, %s36, %s27
      %p38 = scmp.ge.s32.totalorder %s37, 2
      %s39 = scalar_select %p38, 0, %s37
      %s40 = ssub.s32 %s27, %s39
      %p41 = scmp.eq.s32.totalorder %s40, 0
      %s43 = sadd.s32 %s42, 1
      %s44 = scalar_select %p41, %s42, %s43
      %p47 = pneg %p41
      %p48 = scmp.eq.s32.totalorder %s20, 1
      %p49 = por %p47, %p48
      %p50 = scmp.ne.s32.totalorder %s42, %s45
      %p51 = scmp.eq.s32.totalorder %s20, 0
      %p52 = por %p50, %p51
      %p53 = scmp.ne.s32.totalorder %s42, %s45
      %p54 = scmp.eq.s32.totalorder %s25, 1
      %p55 = por %p53, %p54
      %p56 = scmp.ne.s32.totalorder %s45, %s46
      %p57 = scmp.eq.s32.totalorder %s25, 0
      %p58 = por %p56, %p57
      %p59 = scmp.ne.s32.totalorder %s45, %s46
      %p60 = scmp.eq.s32.totalorder %s26, 1
      %p61 = por %p59, %p60
      %p63 = scmp.ne.s32.totalorder %s46, %s62
      %p64 = scmp.eq.s32.totalorder %s26, 0
      %p65 = por %p63, %p64
      %s67 = sadd.s32 %s66, 1
      %p70 = scmp.eq.s32.totalorder %s20, 1
      %p71 = scmp.ne.s32.totalorder %s66, %s68
      %p72 = scmp.eq.s32.totalorder %s20, 0
      %p73 = por %p71, %p72
      %p74 = scmp.ne.s32.totalorder %s66, %s68
      %p75 = scmp.eq.s32.totalorder %s25, 1
      %p76 = por %p74, %p75
      %p77 = scmp.ne.s32.totalorder %s68, %s69
      %p78 = scmp.eq.s32.totalorder %s25, 0
      %p79 = por %p77, %p78
      %p80 = scmp.ne.s32.totalorder %s68, %s69
      %p81 = scmp.eq.s32.totalorder %s26, 1
      %p82 = por %p80, %p81
      %p84 = scmp.ne.s32.totalorder %s69, %s83
      %p85 = scmp.eq.s32.totalorder %s26, 0
      %p86 = por %p84, %p85
      %s88 = sadd.s32 %s87, 1
      %p91 = scmp.eq.s32.totalorder %s20, 1
      %p92 = scmp.ne.s32.totalorder %s87, %s89
      %p93 = scmp.eq.s32.totalorder %s20, 0
      %p94 = por %p92, %p93
      %p95 = scmp.ne.s32.totalorder %s87, %s89
      %p96 = scmp.eq.s32.totalorder %s25, 1
      %p97 = por %p95, %p96
      %p98 = scmp.ne.s32.totalorder %s89, %s90
      %p99 = scmp.eq.s32.totalorder %s25, 0
      %p100 = por %p98, %p99
      %p101 = scmp.ne.s32.totalorder %s89, %s90
      %p102 = scmp.eq.s32.totalorder %s26, 1
      %p103 = por %p101, %p102
      %p105 = scmp.ne.s32.totalorder %s90, %s104
      %p106 = scmp.eq.s32.totalorder %s26, 0
      %p107 = por %p105, %p106
      %s108 = ssub.s32 %s28, %s35
      %p109 = scmp.eq.s32.totalorder %s108, 0
      %s111 = sadd.s32 %s110, 1
      %s112 = scalar_select %p109, %s110, %s111
      %p115 = pneg %p109
      %p116 = scmp.eq.s32.totalorder %s20, 1
      %p117 = por %p115, %p116
      %p118 = scmp.ne.s32.totalorder %s110, %s113
      %p119 = scmp.eq.s32.totalorder %s20, 0
      %p120 = por %p118, %p119
      %p121 = scmp.ne.s32.totalorder %s110, %s113
      %p122 = scmp.eq.s32.totalorder %s25, 1
      %p123 = por %p121, %p122
      %p124 = scmp.ne.s32.totalorder %s113, %s114
      %p125 = scmp.eq.s32.totalorder %s25, 0
      %p126 = por %p124, %p125
      %p127 = scmp.ne.s32.totalorder %s113, %s114
      %p128 = scmp.eq.s32.totalorder %s26, 1
      %p129 = por %p127, %p128
      %p131 = scmp.ne.s32.totalorder %s114, %s130
      %p132 = scmp.eq.s32.totalorder %s26, 0
      %p133 = por %p131, %p132
      %s134 = ssub.s32 %s28, %s35
      %p135 = scmp.eq.s32.totalorder %s134, 0
      %s137 = sadd.s32 %s136, 1
      %s138 = scalar_select %p135, %s136, %s137
      %p141 = pneg %p135
      %p142 = scmp.eq.s32.totalorder %s20, 1
      %p143 = por %p141, %p142
      %p144 = scmp.ne.s32.totalorder %s136, %s139
      %p145 = scmp.eq.s32.totalorder %s20, 0
      %p146 = por %p144, %p145
      %p147 = scmp.ne.s32.totalorder %s136, %s139
      %p148 = scmp.eq.s32.totalorder %s25, 1
      %p149 = por %p147, %p148
      %p150 = scmp.ne.s32.totalorder %s139, %s140
      %p151 = scmp.eq.s32.totalorder %s25, 0
      %p152 = por %p150, %p151
      %p153 = scmp.ne.s32.totalorder %s139, %s140
      %p154 = scmp.eq.s32.totalorder %s26, 1
      %p155 = por %p153, %p154
      %p157 = scmp.ne.s32.totalorder %s140, %s156
      %p158 = scmp.eq.s32.totalorder %s26, 0
      %p159 = por %p157, %p158
      %s160 = ssub.s32 %s28, %s35
      %p161 = scmp.eq.s32.totalorder %s160, 0
      %s163 = sadd.s32 %s162, 1
      %s164 = scalar_select %p161, %s162, %s163
      %p167 = pneg %p161
      %p168 = scmp.eq.s32.totalorder %s20, 1
      %p169 = por %p167, %p168
      %p170 = scmp.ne.s32.totalorder %s162, %s165
      %p171 = scmp.eq.s32.totalorder %s20, 0
      %p172 = por %p170, %p171
      %p173 = scmp.ne.s32.totalorder %s162, %s165
      %p174 = scmp.eq.s32.totalorder %s25, 1
      %p175 = por %p173, %p174
      %p176 = scmp.ne.s32.totalorder %s165, %s166
      %p177 = scmp.eq.s32.totalorder %s25, 0
      %p178 = por %p176, %p177
      %p179 = scmp.ne.s32.totalorder %s165, %s166
      %p180 = scmp.eq.s32.totalorder %s26, 1
      %p181 = por %p179, %p180
      %p183 = scmp.ne.s32.totalorder %s166, %s182
      %p184 = scmp.eq.s32.totalorder %s26, 0
      %p185 = por %p183, %p184
      %s187 = sadd.s32 %s186, 1
      %p190 = scmp.eq.s32.totalorder %s20, 1
      %p191 = scmp.ne.s32.totalorder %s186, %s188
      %p192 = scmp.eq.s32.totalorder %s20, 0
      %p193 = por %p191, %p192
      %p194 = scmp.ne.s32.totalorder %s186, %s188
      %p195 = scmp.eq.s32.totalorder %s25, 1
      %p196 = por %p194, %p195
      %p197 = scmp.ne.s32.totalorder %s188, %s189
      %p198 = scmp.eq.s32.totalorder %s25, 0
      %p199 = por %p197, %p198
      %p200 = scmp.ne.s32.totalorder %s188, %s189
      %p201 = scmp.eq.s32.totalorder %s26, 1
      %p202 = por %p200, %p201
      %p204 = scmp.ne.s32.totalorder %s189, %s203
      %p205 = scmp.eq.s32.totalorder %s26, 0
      %p206 = por %p204, %p205
      %s207 = ssub.s32 %s27, %s39
      %p208 = scmp.eq.s32.totalorder %s207, 0
      %s210 = sadd.s32 %s209, 1
      %s211 = scalar_select %p208, %s209, %s210
      %p214 = pneg %p208
      %p215 = scmp.eq.s32.totalorder %s20, 1
      %p216 = por %p214, %p215
      %p217 = scmp.ne.s32.totalorder %s209, %s212
      %p218 = scmp.eq.s32.totalorder %s20, 0
      %p219 = por %p217, %p218
      %p220 = scmp.ne.s32.totalorder %s209, %s212
      %p221 = scmp.eq.s32.totalorder %s25, 1
      %p222 = por %p220, %p221
      %p223 = scmp.ne.s32.totalorder %s212, %s213
      %p224 = scmp.eq.s32.totalorder %s25, 0
      %p225 = por %p223, %p224
      %p226 = scmp.ne.s32.totalorder %s212, %s213
      %p227 = scmp.eq.s32.totalorder %s26, 1
      %p228 = por %p226, %p227
      %p230 = scmp.ne.s32.totalorder %s213, %s229
      %p231 = scmp.eq.s32.totalorder %s26, 0
      %p232 = por %p230, %p231
      %p233 = scmp.le.s32.totalorder 1, %s20
      %p234 = scmp.lt.s32.totalorder %s20, 3
      %p235 = pnand %p233, %p234
      %p236 = pneg %p235
      // Predicated region
      $region9: #{tpu_custom_call.1} parent=5 // pred_check
        _
      $region10: #{tpu_custom_call.1} parent=5 // pred_check_branch
        %238 = sbr.rel (%p235) target = $region12
      $region11: #{tpu_custom_call.1} parent=5 // pred_region
        %s239 = ssub.s32 %s20, 1
        // Predicated region
        $region13: #{tpu_custom_call.1} parent=11 // pred_check
          %p240 = pneg %p79
        $region14: #{tpu_custom_call.1} parent=11 // pred_check_branch
          %242 = sbr.rel (%p240) target = $region16
        $region15: #{tpu_custom_call.1} parent=11 // pred_region
          _
        $region16: #{tpu_custom_call.1} parent=11 // pred_fallthru
          _
        // Predicated region
        $region17: #{tpu_custom_call.1} parent=11 // pred_check
          %p243 = pneg %p100
        $region18: #{tpu_custom_call.1} parent=11 // pred_check_branch
          %245 = sbr.rel (%p243) target = $region20
        $region19: #{tpu_custom_call.1} parent=11 // pred_region
          _
        $region20: #{tpu_custom_call.1} parent=11 // pred_fallthru
          _
        // Predicated region
        $region21: #{tpu_custom_call.1} parent=11 // pred_check
          %p246 = pneg %p126
        $region22: #{tpu_custom_call.1} parent=11 // pred_check_branch
          %248 = sbr.rel (%p246) target = $region24
        $region23: #{tpu_custom_call.1} parent=11 // pred_region
          %s250 = ssub.s32 2048, 2048
          %251 = vsyncadd [#allocation8], %s250
          %s252 = smul.addr %s30, 128
          %s253 = scalar_lea.hbm %s3, %s252
          %s254 = sshll.u32 [#allocation7], 4
          %s255 = int_to_ptr.vmem [resolvable:$true] %s254
          %260 = dma.hbm_to_vmem [thread:$0]  %s253, 2048, %s255, [#allocation8], 128, 128, 8
        $region24: #{tpu_custom_call.1} parent=11 // pred_fallthru
          _
        // Predicated region
        $region25: #{tpu_custom_call.1} parent=11 // pred_check
          %p261 = pneg %p152
        $region26: #{tpu_custom_call.1} parent=11 // pred_check_branch
          %263 = sbr.rel (%p261) target = $region28
        $region27: #{tpu_custom_call.1} parent=11 // pred_region
          %p264 = scmp.lt.s32.totalorder %s30, 0
          %s265 = scalar_select %p264, %s30, 0
          %s266 = scalar_lea.vmem %s4, %s265
        $region28: #{tpu_custom_call.1} parent=11 // pred_fallthru
          _
        // Predicated region
        $region29: #{tpu_custom_call.1} parent=11 // pred_check
          %p267 = pneg %p178
        $region30: #{tpu_custom_call.1} parent=11 // pred_check_branch
          %269 = sbr.rel (%p267) target = $region32
        $region31: #{tpu_custom_call.1} parent=11 // pred_region
          %s270 = smul.u32 16, %s30
          %s272 = ssub.s32 2048, 2048
          %273 = vsyncadd [#allocation8], %s272
          %s274 = smul.addr %s270, 128
          %s275 = scalar_lea.hbm %s5, %s274
          %s276 = sshll.u32 [#allocation9], 4
          %s277 = int_to_ptr.vmem [resolvable:$true] %s276
          %282 = dma.hbm_to_vmem [thread:$0]  %s275, 2048, %s277, [#allocation8], 128, 128, 8
        $region32: #{tpu_custom_call.1} parent=11 // pred_fallthru
          _
        // Predicated region
        $region33: #{tpu_custom_call.1} parent=11 // pred_check
          %p283 = pneg %p199
        $region34: #{tpu_custom_call.1} parent=11 // pred_check_branch
          %285 = sbr.rel (%p283) target = $region36
        $region35: #{tpu_custom_call.1} parent=11 // pred_region
          _
        $region36: #{tpu_custom_call.1} parent=11 // pred_fallthru
          _
      $region12: #{tpu_custom_call.1} parent=5 // pred_fallthru
        _
      %p286 = scmp.lt.s32.totalorder %s20, 2
      // Predicated region
      $region37: #{tpu_custom_call.1} parent=5 // pred_check
        %p287 = pneg %p286
      $region38: #{tpu_custom_call.1} parent=5 // pred_check_branch
        %289 = sbr.rel (%p287) target = $region40
      $region39: #{tpu_custom_call.1} parent=5 // pred_region
        // Predicated region
        $region41: #{tpu_custom_call.1} parent=39 // pred_check
          %p290 = pneg %p52
        $region42: #{tpu_custom_call.1} parent=39 // pred_check_branch
          %292 = sbr.rel (%p290) target = $region44
        $region43: #{tpu_custom_call.1} parent=39 // pred_region
          %s293 = sand.u32 %s42, 1
          %s294 = scalar_lea.sflag [#allocation5], %s293
          %s295 = sand.u32 %s42, 1
          %s296 = smul.addr %s295, 8
          %s297 = scalar_lea.vmem [#allocation4], %s296
          %s299 = ssub.s32 128, 128
          %300 = vsyncadd %s294, %s299
          %s301 = smul.addr %s27, 128
          %s302 = scalar_lea.hbm %s0, %s301
          %s304 = sshll.u32 %s297, 4
          %s305 = int_to_ptr.vmem [resolvable:$true] %s304
          %307 = dma.hbm_to_vmem [thread:$0]  %s302, 128, %s305, %s294
        $region44: #{tpu_custom_call.1} parent=39 // pred_fallthru
          _
      $region40: #{tpu_custom_call.1} parent=5 // pred_fallthru
        _
      %p308 = scmp.le.s32.totalorder 1, %s20
      %p309 = scmp.lt.s32.totalorder %s20, 3
      %p310 = pnand %p308, %p309
      %p311 = pneg %p310
      // Predicated region
      $region45: #{tpu_custom_call.1} parent=5 // pred_check
        _
      $region46: #{tpu_custom_call.1} parent=5 // pred_check_branch
        %313 = sbr.rel (%p310) target = $region48
      $region47: #{tpu_custom_call.1} parent=5 // pred_region
        %s314 = ssub.s32 %s20, 1
        %s315 = sand.u32 %s45, 1
        %s316 = scalar_lea.sflag [#allocation5], %s315
        %s317 = sand.u32 %s45, 1
        %s318 = smul.addr %s317, 8
        %s319 = scalar_lea.vmem [#allocation4], %s318
        // Predicated region
        $region49: #{tpu_custom_call.1} parent=47 // pred_check
          %p320 = pneg %p58
        $region50: #{tpu_custom_call.1} parent=47 // pred_check_branch
          %322 = sbr.rel (%p320) target = $region52
        $region51: #{tpu_custom_call.1} parent=47 // pred_region
          %323 = dma.done %s316, 128
        $region52: #{tpu_custom_call.1} parent=47 // pred_fallthru
          _
        // Predicated region
        $region53: #{tpu_custom_call.1} parent=47 // pred_check
          %p324 = pneg %p126
        $region54: #{tpu_custom_call.1} parent=47 // pred_check_branch
          %326 = sbr.rel (%p324) target = $region56
        $region55: #{tpu_custom_call.1} parent=47 // pred_region
          %327 = dma.done [#allocation8], 2048
        $region56: #{tpu_custom_call.1} parent=47 // pred_fallthru
          _
        // Predicated region
        $region57: #{tpu_custom_call.1} parent=47 // pred_check
          %p328 = pneg %p178
        $region58: #{tpu_custom_call.1} parent=47 // pred_check_branch
          %330 = sbr.rel (%p328) target = $region60
        $region59: #{tpu_custom_call.1} parent=47 // pred_region
          %331 = dma.done [#allocation8], 2048
        $region60: #{tpu_custom_call.1} parent=47 // pred_fallthru
          _
        %s332 = sand.u32 %s45, 1
        %s333 = scalar_lea.sflag [#allocation5], %s332
        %s334 = sand.u32 %s45, 1
        %s335 = smul.addr %s334, 8
        %s336 = scalar_lea.vmem [#allocation4], %s335
        %p337 = pneg %p58
        %p338 = pneg %p55
        %p339 = pneg %p79
        %p340 = pneg %p76
        %p341 = pneg %p100
        %p342 = pneg %p97
        %p343 = pneg %p126
        %p344 = pneg %p123
        %p345 = scmp.lt.s32.totalorder %s30, 0
        %s346 = scalar_select %p345, %s30, 0
        %s347 = scalar_lea.vmem %s4, %s346
        %p348 = pneg %p152
        %p349 = pneg %p149
        %p350 = pneg %p178
        %p351 = pneg %p175
        %p352 = pneg %p199
        %p353 = pneg %p196
        %p354 = pneg %p225
        %p355 = pneg %p222
        %s356 = sand.u32 %s212, 1
        %s357 = scalar_lea.sflag [#allocation6], %s356
        %s358 = sand.u32 %s212, 1
        %s359 = smul.addr %s358, 8
        %s360 = scalar_lea.vmem [#allocation10], %s359
        %p361 = scmp.lt.s32.totalorder %s30, 0
        %s362 = scalar_select %p361, %s30, 0
        %s363 = scalar_lea.vmem %s4, %s362
        %s364 = smul.u32 16, %s30
        %p365 = scmp.eq.s32.totalorder %s30, 0
        // Predicated region
        $region61: #{tpu_custom_call.1} parent=47 // pred_check
          %p366 = pneg %p365
        $region62: #{tpu_custom_call.1} parent=47 // pred_check_branch
          %368 = sbr.rel (%p366) target = $region64
        $region63: #{tpu_custom_call.1} parent=47 // pred_region
          %v369 = vld [vmem:[%s319] sm:$0xff]
          %370 = vadd.xlane.f32.xlu0 %v369
          %v371 = vpop.xlane.xlu0 %370
          %v372 = vmul.f32 %v371, 0.03125
          %v373 = vmul.f32 %v369, %v369
          %374 = vadd.xlane.f32.xlu0 %v373
          %v375 = vpop.xlane.xlu0 %374
          %v376 = vmul.f32 %v375, 0.03125
          %v377 = vmul.f32 %v372, %v372
          %v378 = vsub.f32 %v376, %v377
          %v379 = vmax.f32 %v378, 0.0
          %v380 = vsub.f32 %v369, %v372
          %v381 = vadd.f32 %v379, 1e-05
          %v382 = vrsqrt.pop %v381
          %v383 = vmul.f32 %v380, %v382
          %v384 = vld [vmem:[%s1] sm:$0x1]
          %v386 = vlaneseq
          %v387 = vshrl.u32 %v386, 7
          %v388 = vsub.s32 0, %v387
          %v389 = vrot.slane %v384, %v388
          %v391 = vmul.f32 %v383, %v389
          %v392 = vld [vmem:[%s2] sm:$0x1]
          %v394 = vlaneseq
          %v395 = vshrl.u32 %v394, 7
          %v396 = vsub.s32 0, %v395
          %v397 = vrot.slane %v392, %v396
          %v399 = vadd.f32 %v391, %v397
          %v400 = vld [vmem:[%s6] sm:$0x1]
          %v402 = vlaneseq
          %v403 = vshrl.u32 %v402, 7
          %v404 = vsub.s32 0, %v403
          %v405 = vrot.slane %v400, %v404
          %v407 = vadd.f32 %v399, %v405
          %408 = vst [vmem:[#allocation3] sm:$0xff] %v407
          %409 = vst [vmem:[#allocation2] sm:$0xff] %v399
        $region64: #{tpu_custom_call.1} parent=47 // pred_fallthru
          _
        %v410 = vld [vmem:[#allocation2] sm:$0xff]
        %v411 = vld [vmem:[#allocation7] sm:$0xff]
        %v412 = vld [vmem:[#allocation7 + $0x8] sm:$0xff]
        %v413 = vld [vmem:[#allocation7 + $0x10] sm:$0xff]
        %v414 = vld [vmem:[#allocation7 + $0x18] sm:$0xff]
        %v415 = vld [vmem:[#allocation7 + $0x20] sm:$0xff]
        %v416 = vld [vmem:[#allocation7 + $0x28] sm:$0xff]
        %v417 = vld [vmem:[#allocation7 + $0x30] sm:$0xff]
        %v418 = vld [vmem:[#allocation7 + $0x38] sm:$0xff]
        %v419 = vld [vmem:[#allocation7 + $0x40] sm:$0xff]
        %v420 = vld [vmem:[#allocation7 + $0x48] sm:$0xff]
        %v421 = vld [vmem:[#allocation7 + $0x50] sm:$0xff]
        %v422 = vld [vmem:[#allocation7 + $0x58] sm:$0xff]
        %v423 = vld [vmem:[#allocation7 + $0x60] sm:$0xff]
        %v424 = vld [vmem:[#allocation7 + $0x68] sm:$0xff]
        %v425 = vld [vmem:[#allocation7 + $0x70] sm:$0xff]
        %v426 = vld [vmem:[#allocation7 + $0x78] sm:$0xff]
        %v427 = vld [vmem:[%s363] sm:$0x1]
        %v429 = vlaneseq
        %v430 = vshrl.u32 %v429, 7
        %v431 = vsub.s32 0, %v430
        %v432 = vrot.slane %v427, %v431
        %434 = vmatprep.subr.mxu0 0.0
        %435 = vmatpush1.msra.mxu0 %v411
        %436 = vmatprep.subr.mxu0 0.0
        %437 = vmatpush1.msra.mxu0 %v412
        %438 = vmatprep.subr.mxu0 0.0
        %439 = vmatpush1.msra.mxu0 %v413
        %440 = vmatprep.subr.mxu0 0.0
        %441 = vmatpush1.msra.mxu0 %v414
        %442 = vmatprep.subr.mxu0 0.0
        %443 = vmatpush1.msra.mxu0 %v415
        %444 = vmatprep.subr.mxu0 0.0
        %445 = vmatpush1.msra.mxu0 %v416
        %446 = vmatprep.subr.mxu0 0.0
        %447 = vmatpush1.msra.mxu0 %v417
        %448 = vmatprep.subr.mxu0 0.0
        %449 = vmatpush1.msra.mxu0 %v418
        %450 = vmatprep.subr.mxu0 0.0
        %451 = vmatpush1.msra.mxu0 %v419
        %452 = vmatprep.subr.mxu0 0.0
        %453 = vmatpush1.msra.mxu0 %v420
        %454 = vmatprep.subr.mxu0 0.0
        %455 = vmatpush1.msra.mxu0 %v421
        %456 = vmatprep.subr.mxu0 0.0
        %457 = vmatpush1.msra.mxu0 %v422
        %458 = vmatprep.subr.mxu0 0.0
        %459 = vmatpush1.msra.mxu0 %v423
        %460 = vmatprep.subr.mxu0 0.0
        %461 = vmatpush1.msra.mxu0 %v424
        %462 = vmatprep.subr.mxu0 0.0
        %463 = vmatpush1.msra.mxu0 %v425
        %464 = vmatprep.subr.mxu0 0.0
        %465 = vmatpush1.msra.mxu0 %v426
        %466 = vmatprep.subr.mxu0 0.0
        %467 = vmatpush1.msra.mxu0 0.0
        %468 = vmatprep.subr.mxu0 0.0
        %469 = vmatpush1.msra.mxu0 0.0
        %470 = vmatprep.subr.mxu0 0.0
        %471 = vmatpush1.msra.mxu0 0.0
        %472 = vmatprep.subr.mxu0 0.0
        %473 = vmatpush1.msra.mxu0 0.0
        %474 = vmatprep.subr.mxu0 0.0
        %475 = vmatpush1.msra.mxu0 0.0
        %476 = vmatprep.subr.mxu0 0.0
        %477 = vmatpush1.msra.mxu0 0.0
        %478 = vmatprep.subr.mxu0 0.0
        %479 = vmatpush1.msra.mxu0 0.0
        %480 = vmatprep.subr.mxu0 0.0
        %481 = vmatpush1.msra.mxu0 0.0
        %482 = vmatprep.subr.mxu0 0.0
        %483 = vmatpush1.msra.mxu0 0.0
        %484 = vmatprep.subr.mxu0 0.0
        %485 = vmatpush1.msra.mxu0 0.0
        %486 = vmatprep.subr.mxu0 0.0
        %487 = vmatpush1.msra.mxu0 0.0
        %488 = vmatprep.subr.mxu0 0.0
        %489 = vmatpush1.msra.mxu0 0.0
        %490 = vmatprep.subr.mxu0 0.0
        %491 = vmatpush1.msra.mxu0 0.0
        %492 = vmatprep.subr.mxu0 0.0
        %493 = vmatpush1.msra.mxu0 0.0
        %494 = vmatprep.subr.mxu0 0.0
        %495 = vmatpush1.msra.mxu0 0.0
        %496 = vmatprep.subr.mxu0 0.0
        %497 = vmatpush1.msra.mxu0 0.0
        %498 = vmatprep.mubr.f32.mxu0 0.0
        %499 = vmatmul.mubr.f32.gmra.mrb[0].mxu0 %v410
        %v500 = vpop.f32.mrb[0].mxu0
        %v501 = vadd.f32 %v432, %v500
        %v502 = vpop.f32.mrb[0].mxu0
        %503 = vdwg.mxu0
        %v504 = vmul.f32 %v501, 0.5
        %v505 = vmul.f32 %v501, 0.70710677
        %v506 = verf.f32.pop %v505
        %v507 = vadd.f32 %v506, 1.0
        %v508 = vmul.f32 %v504, %v507
        %v509 = vld [vmem:[#allocation3] sm:$0xff]
        %v510 = vld [vmem:[#allocation9] sm:$0xff]
        %v511 = vld [vmem:[#allocation9 + $0x8] sm:$0xff]
        %v512 = vld [vmem:[#allocation9 + $0x10] sm:$0xff]
        %v513 = vld [vmem:[#allocation9 + $0x18] sm:$0xff]
        %v514 = vld [vmem:[#allocation9 + $0x20] sm:$0xff]
        %v515 = vld [vmem:[#allocation9 + $0x28] sm:$0xff]
        %v516 = vld [vmem:[#allocation9 + $0x30] sm:$0xff]
        %v517 = vld [vmem:[#allocation9 + $0x38] sm:$0xff]
        %v518 = vld [vmem:[#allocation9 + $0x40] sm:$0xff]
        %v519 = vld [vmem:[#allocation9 + $0x48] sm:$0xff]
        %v520 = vld [vmem:[#allocation9 + $0x50] sm:$0xff]
        %v521 = vld [vmem:[#allocation9 + $0x58] sm:$0xff]
        %v522 = vld [vmem:[#allocation9 + $0x60] sm:$0xff]
        %v523 = vld [vmem:[#allocation9 + $0x68] sm:$0xff]
        %v524 = vld [vmem:[#allocation9 + $0x70] sm:$0xff]
        %v525 = vld [vmem:[#allocation9 + $0x78] sm:$0xff]
        %526 = vmatprep.subr.mxu0 0.0
        %527 = vmatpush1.msra.mxu0 %v510
        %528 = vmatprep.subr.mxu0 0.0
        %529 = vmatpush1.msra.mxu0 %v511
        %530 = vmatprep.subr.mxu0 0.0
        %531 = vmatpush1.msra.mxu0 %v512
        %532 = vmatprep.subr.mxu0 0.0
        %533 = vmatpush1.msra.mxu0 %v513
        %534 = vmatprep.subr.mxu0 0.0
        %535 = vmatpush1.msra.mxu0 %v514
        %536 = vmatprep.subr.mxu0 0.0
        %537 = vmatpush1.msra.mxu0 %v515
        %538 = vmatprep.subr.mxu0 0.0
        %539 = vmatpush1.msra.mxu0 %v516
        %540 = vmatprep.subr.mxu0 0.0
        %541 = vmatpush1.msra.mxu0 %v517
        %542 = vmatprep.subr.mxu0 0.0
        %543 = vmatpush1.msra.mxu0 %v518
        %544 = vmatprep.subr.mxu0 0.0
        %545 = vmatpush1.msra.mxu0 %v519
        %546 = vmatprep.subr.mxu0 0.0
        %547 = vmatpush1.msra.mxu0 %v520
        %548 = vmatprep.subr.mxu0 0.0
        %549 = vmatpush1.msra.mxu0 %v521
        %550 = vmatprep.subr.mxu0 0.0
        %551 = vmatpush1.msra.mxu0 %v522
        %552 = vmatprep.subr.mxu0 0.0
        %553 = vmatpush1.msra.mxu0 %v523
        %554 = vmatprep.subr.mxu0 0.0
        %555 = vmatpush1.msra.mxu0 %v524
        %556 = vmatprep.subr.mxu0 0.0
        %557 = vmatpush1.msra.mxu0 %v525
        %558 = vmatprep.subr.mxu0 0.0
        %559 = vmatpush1.msra.mxu0 0.0
        %560 = vmatprep.subr.mxu0 0.0
        %561 = vmatpush1.msra.mxu0 0.0
        %562 = vmatprep.subr.mxu0 0.0
        %563 = vmatpush1.msra.mxu0 0.0
        %564 = vmatprep.subr.mxu0 0.0
        %565 = vmatpush1.msra.mxu0 0.0
        %566 = vmatprep.subr.mxu0 0.0
        %567 = vmatpush1.msra.mxu0 0.0
        %568 = vmatprep.subr.mxu0 0.0
        %569 = vmatpush1.msra.mxu0 0.0
        %570 = vmatprep.subr.mxu0 0.0
        %571 = vmatpush1.msra.mxu0 0.0
        %572 = vmatprep.subr.mxu0 0.0
        %573 = vmatpush1.msra.mxu0 0.0
        %574 = vmatprep.subr.mxu0 0.0
        %575 = vmatpush1.msra.mxu0 0.0
        %576 = vmatprep.subr.mxu0 0.0
        %577 = vmatpush1.msra.mxu0 0.0
        %578 = vmatprep.subr.mxu0 0.0
        %579 = vmatpush1.msra.mxu0 0.0
        %580 = vmatprep.subr.mxu0 0.0
        %581 = vmatpush1.msra.mxu0 0.0
        %582 = vmatprep.subr.mxu0 0.0
        %583 = vmatpush1.msra.mxu0 0.0
        %584 = vmatprep.subr.mxu0 0.0
        %585 = vmatpush1.msra.mxu0 0.0
        %586 = vmatprep.subr.mxu0 0.0
        %587 = vmatpush1.msra.mxu0 0.0
        %588 = vmatprep.subr.mxu0 0.0
        %589 = vmatpush1.msra.mxu0 0.0
        %590 = vmatprep.mubr.f32.mxu0 0.0
        %591 = vmatmul.mubr.f32.gmra.mrb[0].mxu0 %v508
        %v592 = vpop.f32.mrb[0].mxu0
        %v593 = vadd.f32 0.0, %v592
        %v594 = vpop.f32.mrb[0].mxu0
        %595 = vdwg.mxu0
        %v596 = vadd.f32 %v509, %v593
        %597 = vst [vmem:[#allocation3] sm:$0xff] %v596
        // Predicated region
        $region65: #{tpu_custom_call.1} parent=47 // pred_check
          %p598 = pneg %p365
        $region66: #{tpu_custom_call.1} parent=47 // pred_check_branch
          %600 = sbr.rel (%p598) target = $region68
        $region67: #{tpu_custom_call.1} parent=47 // pred_region
          %v601 = vld [vmem:[#allocation3] sm:$0xff]
          %602 = vst [vmem:[%s360] sm:$0xff] %v601
        $region68: #{tpu_custom_call.1} parent=47 // pred_fallthru
          _
        %s603 = sand.u32 %s212, 1
        %s604 = scalar_lea.sflag [#allocation6], %s603
        %s605 = sand.u32 %s212, 1
        %s606 = smul.addr %s605, 8
        %s607 = scalar_lea.vmem [#allocation10], %s606
        // Predicated region
        $region69: #{tpu_custom_call.1} parent=47 // pred_check
          %p608 = pneg %p222
        $region70: #{tpu_custom_call.1} parent=47 // pred_check_branch
          %610 = sbr.rel (%p608) target = $region72
        $region71: #{tpu_custom_call.1} parent=47 // pred_region
          %s612 = ssub.s32 128, 128
          %613 = vsyncadd %s604, %s612
          %s614 = smul.addr %s29, 128
          %s615 = scalar_lea.hbm %s7, %s614
          %s617 = sshll.u32 %s607, 4
          %s618 = int_to_ptr.vmem [resolvable:$true] %s617
          %620 = dma.vmem_to_hbm [thread:$0]  %s618, 128, %s615, %s604
        $region72: #{tpu_custom_call.1} parent=47 // pred_fallthru
          _
      $region48: #{tpu_custom_call.1} parent=5 // pred_fallthru
        _
      %p621 = scmp.le.s32.totalorder 2, %s20
      // Predicated region
      $region73: #{tpu_custom_call.1} parent=5 // pred_check
        %p622 = pneg %p621
      $region74: #{tpu_custom_call.1} parent=5 // pred_check_branch
        %624 = sbr.rel (%p622) target = $region76
      $region75: #{tpu_custom_call.1} parent=5 // pred_region
        %s625 = ssub.s32 %s20, 2
        // Predicated region
        $region77: #{tpu_custom_call.1} parent=75 // pred_check
          %p626 = pneg %p228
        $region78: #{tpu_custom_call.1} parent=75 // pred_check_branch
          %628 = sbr.rel (%p626) target = $region80
        $region79: #{tpu_custom_call.1} parent=75 // pred_region
          %s629 = sand.u32 %s213, 1
          %s630 = scalar_lea.sflag [#allocation6], %s629
          %s631 = sand.u32 %s213, 1
          %s632 = smul.addr %s631, 8
          %s633 = scalar_lea.vmem [#allocation10], %s632
          %634 = dma.done %s630, 128
        $region80: #{tpu_custom_call.1} parent=75 // pred_fallthru
          _
      $region76: #{tpu_custom_call.1} parent=5 // pred_fallthru
        _
    $region6: #{tpu_custom_call.1} parent=1 // loop_footer
      %s24 = sadd.s32 1, %s20
    $region7: #{tpu_custom_call.1} parent=1 // loop_footer_branch
      %19 = sbr.rel target = $region3
    $region8: #{tpu_custom_call.1} parent=1 // loop_exit
      _
    %635 = vsyncpa [#allocation5], 1
    %s636 = scalar_lea.sflag [#allocation5], 1
    %637 = vsyncpa %s636, 1
    %638 = vsyncpa [#allocation8], 1
    %639 = vsyncpa [#allocation6], 1
    %s640 = scalar_lea.sflag [#allocation6], 1
    %641 = vsyncpa %s640, 1

</llo_original>
